<compile_context>
chip_gen: v5e
topology: v5e:2x2
jax: 0.10.0
libtpu: 0.0.40
codegen_flags: <defaults>
</compile_context>

<pallas_src>
import functools

import jax
import jax.numpy as jnp
from jax import lax
from jax.experimental import pallas as pl
from jax.experimental.pallas import tpu as pltpu


def attn_block_kernel(x_ref, wqkv_ref, bqkv_ref, wo_ref, bo_ref, o_ref, qkv_ref,
                      *, n_heads, d_k, tq, s_valid, s_pad):
    """One (batch, query-tile) grid step.

    x_ref   : (1, C, S_pad)   channels-first input block (resident across qi)
    wqkv_ref: (3*hd, C)       regrouped [Q|K|V] weight, Q rows pre-scaled
    bqkv_ref: (3*hd, 1)
    wo_ref  : (C, hd)         output projection weight (PyTorch [out, in])
    bo_ref  : (C, 1)
    o_ref   : (1, C, TQ)      channels-first, lane-dense output tile
    qkv_ref : (3*hd, S_pad)   f32 persistent VMEM scratch (cached QKV projection)
    """
    hd = n_heads * d_k
    qi = pl.program_id(1)

    # Cache the full-sequence QKV projection once per batch element.
    @pl.when(qi == 0)
    def _():
        x_full = x_ref[0].astype(jnp.float32)                        # (C, S_pad)
        qkv_ref[...] = (
            jnp.dot(wqkv_ref[...].astype(jnp.float32), x_full,
                    preferred_element_type=jnp.float32)
            + bqkv_ref[...].astype(jnp.float32))

    q0 = pl.multiple_of(qi * tq, tq)

    head_outs = []
    for h in range(n_heads):                                         # static unroll
        q = qkv_ref[h * d_k:(h + 1) * d_k, pl.ds(q0, tq)]            # (d_k, TQ)
        k = qkv_ref[hd + h * d_k:hd + (h + 1) * d_k, :]              # (d_k, S_pad)
        v = qkv_ref[2 * hd + h * d_k:2 * hd + (h + 1) * d_k, :]      # (d_k, S_pad)

        # Scores (scale already folded into Q weights in the wrapper).
        s = jnp.dot(q.T, k, preferred_element_type=jnp.float32)      # (TQ, S_pad)
        if s_pad != s_valid:                                         # mask padded keys
            col = lax.broadcasted_iota(jnp.int32, s.shape, 1)
            s = jnp.where(col < s_valid, s, -jnp.inf)
        s = s - jnp.max(s, axis=-1, keepdims=True)                   # stable softmax
        p = jnp.exp(s)
        l = jnp.sum(p, axis=-1, keepdims=True)                       # (TQ, 1)

        # Un-normalized PV matmul, then normalize on the small (d_k, TQ) tile.
        o_h = lax.dot_general(v, p, (((1,), (1,)), ((), ())),
                              preferred_element_type=jnp.float32)    # (d_k, TQ)
        o_h = o_h * pl.reciprocal(l, approx=True).T                  # (1, TQ) bcast
        head_outs.append(o_h)

    res = head_outs[0] if n_heads == 1 else jnp.concatenate(head_outs, axis=0)

    out = jnp.dot(wo_ref[...].astype(jnp.float32), res,
                  preferred_element_type=jnp.float32)                # (C, TQ)
    out = out + bo_ref[...].astype(jnp.float32)
    out = out + x_ref[0, :, pl.ds(q0, tq)].astype(jnp.float32)       # residual
    o_ref[0] = out.astype(o_ref.dtype)


def attention_block(x_nchw, t, w_qkv, b_qkv, w_out, b_out, *, n_heads=1, d_k=None):
    """x_nchw: [B, C, H, W]; weights in PyTorch Linear convention ([out, in])."""
    _ = t  # forward(x, t): t is unused
    B, C, H, W = x_nchw.shape
    S = H * W
    if d_k is None:
        d_k = C
    hd = n_heads * d_k
    scale = float(d_k) ** -0.5

    # Pad S up to a multiple of 128 (lane-dense stores, real pipelining even for
    # e.g. 28x28=784). Padded keys are masked to -inf in-kernel.
    s_pad = ((S + 127) // 128) * 128
    # Fatter tiles amortize per-grid-step overhead; 256 stays within the v7x
    # VMEM budget while helping v5e/v6e store width.
    tq = 256 if s_pad % 256 == 0 else 128

    # Channels-first input: just a reshape (no transpose pass over HBM).
    x_cs = x_nchw.reshape(B, C, S)
    if s_pad != S:
        x_cs = jnp.pad(x_cs, ((0, 0), (0, 0), (0, s_pad - S)))

    # Regroup projection rows from per-head [q|k|v] to [all-Q | all-K | all-V]
    # and fold the 1/sqrt(d_k) scale into the Q rows / bias (one-time cost).
    wqkv = jnp.transpose(w_qkv.reshape(n_heads, 3, d_k, C), (1, 0, 2, 3)).reshape(3 * hd, C)
    bqkv = jnp.transpose(b_qkv.reshape(n_heads, 3, d_k), (1, 0, 2)).reshape(3 * hd)
    sec_scale = jnp.concatenate([jnp.full((hd,), scale, wqkv.dtype),
                                 jnp.ones((2 * hd,), wqkv.dtype)])
    wqkv = wqkv * sec_scale[:, None]
    bqkv = (bqkv * sec_scale).reshape(3 * hd, 1)
    wo = w_out                      # (C, hd): already the channels-first layout we need
    bo = b_out.reshape(C, 1)

    kernel = functools.partial(attn_block_kernel, n_heads=n_heads, d_k=d_k,
                               tq=tq, s_valid=S, s_pad=s_pad)

    out_cs = pl.pallas_call(
        kernel,
        out_shape=jax.ShapeDtypeStruct((B, C, s_pad), x_nchw.dtype),
        grid_spec=pltpu.PrefetchScalarGridSpec(
            num_scalar_prefetch=0,
            grid=(B, s_pad // tq),
            in_specs=[
                # full channels-first sequence (resident across qi; no re-DMA)
                pl.BlockSpec((1, C, s_pad), lambda b, qi: (b, 0, 0)),
                pl.BlockSpec((3 * hd, C), lambda b, qi: (0, 0)),
                pl.BlockSpec((3 * hd, 1), lambda b, qi: (0, 0)),
                pl.BlockSpec((C, hd), lambda b, qi: (0, 0)),
                pl.BlockSpec((C, 1), lambda b, qi: (0, 0)),
            ],
            # channels-first, lane-dense output slab [B, C, S_pad]
            out_specs=pl.BlockSpec((1, C, tq), lambda b, qi: (b, 0, qi)),
            # cached full-sequence QKV projection (persists across qi)
            scratch_shapes=[pltpu.VMEM((3 * hd, s_pad), jnp.float32)],
        ),
        compiler_params=pltpu.CompilerParams(
            # qi must be "arbitrary": the cached QKV scratch persists across it.
            # b stays "parallel" (megacore split on multi-TC parts).
            dimension_semantics=("parallel", "arbitrary"),
            vmem_limit_bytes=48 * 1024 * 1024,   # safe for v7x's 64 MiB parts too
        ),
    )(x_cs, wqkv, bqkv, wo, bo)

    if s_pad != S:
        out_cs = out_cs[:, :, :S]
    return out_cs.reshape(B, C, H, W)


def attention_block_reference(x, w_qkv, b_qkv, w_out, b_out, n_heads, d_k):
    """Pure-JAX replica of the PyTorch forward (for correctness checking)."""
    B, C, H, W = x.shape
    S = H * W
    xs = jnp.transpose(x.reshape(B, C, S), (0, 2, 1))                 # [B, S, C]
    qkv = xs @ w_qkv.T + b_qkv                                        # [B, S, 3*H*d_k]
    qkv = qkv.reshape(B, S, n_heads, 3 * d_k)
    q, k, v = jnp.split(qkv, 3, axis=-1)
    attn = jnp.einsum('bihd,bjhd->bijh', q, k) * (float(d_k) ** -0.5)
    attn = jax.nn.softmax(attn, axis=2)
    res = jnp.einsum('bijh,bjhd->bihd', attn, v)
    res = res.reshape(B, S, n_heads * d_k)
    res = res @ w_out.T + b_out
    res = res + xs
    return jnp.transpose(res, (0, 2, 1)).reshape(B, C, H, W)


if __name__ == "__main__":
    key = jax.random.PRNGKey(0)
    kx, kt, k1, k2, k3, k4 = jax.random.split(key, 6)

    B, C, H, W = 2, 4, 16, 16
    n_heads = 1
    d_k = C                      # module default: d_k = n_channels
    hd = n_heads * d_k

    x = jax.random.normal(kx, (B, C, H, W), jnp.float32)
    t = jax.random.normal(kt, (B, 8), jnp.float32)   # unused, mirrors forward(x, t)

    # PyTorch Linear default init: U(-1/sqrt(fan_in), 1/sqrt(fan_in)), weights [out, in]
    b1 = 1.0 / (C ** 0.5)
    w_qkv = jax.random.uniform(k1, (3 * hd, C), jnp.float32, -b1, b1)
    b_qkv = jax.random.uniform(k2, (3 * hd,), jnp.float32, -b1, b1)
    b2 = 1.0 / (hd ** 0.5)
    w_out = jax.random.uniform(k3, (C, hd), jnp.float32, -b2, b2)
    b_out = jax.random.uniform(k4, (C,), jnp.float32, -b2, b2)

    out = jax.block_until_ready(
        attention_block(x, t, w_qkv, b_qkv, w_out, b_out, n_heads=n_heads, d_k=d_k))
    assert out.shape == (B, C, H, W), out.shape

    ref = attention_block_reference(x, w_qkv, b_qkv, w_out, b_out, n_heads, d_k)
    max_err = float(jnp.max(jnp.abs(out - ref)))
    # slightly loosened vs f32-exact: EUP approximate reciprocal in the softmax epilogue
    assert jnp.allclose(out, ref, atol=2e-3, rtol=2e-3), max_err

    print("KERNEL_OK")
</pallas_src>

<mosaic_0001>
module attributes {stable_mosaic.version = 11 : i64} {
  func.func @attn_block_kernel(%arg0: i32, %arg1: i32, %arg2: memref<1x4x256xf32, #tpu.memory_space<vmem>>, %arg3: memref<12x4xf32, #tpu.memory_space<vmem>>, %arg4: memref<12x1xf32, #tpu.memory_space<vmem>>, %arg5: memref<4x4xf32, #tpu.memory_space<vmem>>, %arg6: memref<4x1xf32, #tpu.memory_space<vmem>>, %arg7: memref<1x4x256xf32, #tpu.memory_space<vmem>>, %arg8: memref<12x256xf32, #tpu.memory_space<vmem>>) attributes {dimension_semantics = [#tpu.dimension_semantics<parallel>, #tpu.dimension_semantics<arbitrary>], iteration_bounds = array<i64: 2, 1>, scalar_prefetch = 0 : i64, scratch_operands = 1 : i64, tpu.core_type = #tpu.core_type<tc>, window_params = [{transform_indices = @transform_0, window_bounds = array<i64: 1, 4, 256>}, {pipeline_mode = #tpu.pipeline_mode<synchronous>, transform_indices = @transform_1, window_bounds = array<i64: 12, 4>}, {pipeline_mode = #tpu.pipeline_mode<synchronous>, transform_indices = @transform_2, window_bounds = array<i64: 12, 1>}, {pipeline_mode = #tpu.pipeline_mode<synchronous>, transform_indices = @transform_3, window_bounds = array<i64: 4, 4>}, {pipeline_mode = #tpu.pipeline_mode<synchronous>, transform_indices = @transform_4, window_bounds = array<i64: 4, 1>}, {transform_indices = @transform_5, window_bounds = array<i64: 1, 4, 256>}]} {
    %c0_i32 = arith.constant 0 : i32
    %0 = arith.cmpi eq, %arg1, %c0_i32 : i32
    %1 = arith.extui %0 : i1 to i32
    %c0_i32_0 = arith.constant 0 : i32
    %2 = arith.cmpi ne, %1, %c0_i32_0 : i32
    scf.if %2 {
      %c0_16 = arith.constant 0 : index
      %c0_17 = arith.constant 0 : index
      %c0_18 = arith.constant 0 : index
      %35 = vector.load %arg2[%c0_16, %c0_17, %c0_18] : memref<1x4x256xf32, #tpu.memory_space<vmem>>, vector<1x4x256xf32>
      %36 = vector.shape_cast %35 : vector<1x4x256xf32> to vector<4x256xf32>
      %c0_19 = arith.constant 0 : index
      %c0_20 = arith.constant 0 : index
      %37 = vector.load %arg3[%c0_19, %c0_20] : memref<12x4xf32, #tpu.memory_space<vmem>>, vector<12x4xf32>
      %cst_21 = arith.constant dense<0.000000e+00> : vector<12x256xf32>
      %38 = tpu.matmul %37, %36, %cst_21 {dimension_numbers = #tpu.dot_dimension_numbers<[1], [0], [0], [1], [0, 0, 1, 1], [], []>} : vector<12x4xf32>, vector<4x256xf32>, vector<12x256xf32> -> vector<12x256xf32>
      %c0_22 = arith.constant 0 : index
      %c0_23 = arith.constant 0 : index
      %39 = vector.load %arg4[%c0_22, %c0_23] : memref<12x1xf32, #tpu.memory_space<vmem>>, vector<12x1xf32>
      %40 = vector.broadcast %39 : vector<12x1xf32> to vector<12x256xf32>
      %41 = arith.addf %38, %40 : vector<12x256xf32>
      %c0_24 = arith.constant 0 : index
      %c0_25 = arith.constant 0 : index
      %42 = vector.load %arg8[%c0_24, %c0_25] : memref<12x256xf32, #tpu.memory_space<vmem>>, vector<12x256xf32>
      tpu.vector_store %arg8[%c0_24, %c0_25], %41 {strides = array<i32>} : memref<12x256xf32, #tpu.memory_space<vmem>>, vector<12x256xf32>,
    } else {
    }
    %c256_i32 = arith.constant 256 : i32
    %3 = arith.muli %arg1, %c256_i32 : i32
    %4 = tpu.assume_multiple %3, 256 : i32
    %c0 = arith.constant 0 : index
    %5 = arith.index_cast %4 : i32 to index
    %6 = vector.load %arg8[%c0, %5] : memref<12x256xf32, #tpu.memory_space<vmem>>, vector<4x256xf32>
    %c4 = arith.constant 4 : index
    %c0_1 = arith.constant 0 : index
    %7 = vector.load %arg8[%c4, %c0_1] : memref<12x256xf32, #tpu.memory_space<vmem>>, vector<4x256xf32>
    %c8 = arith.constant 8 : index
    %c0_2 = arith.constant 0 : index
    %8 = vector.load %arg8[%c8, %c0_2] : memref<12x256xf32, #tpu.memory_space<vmem>>, vector<4x256xf32>
    %9 = tpu.transpose %6, [1, 0] : vector<4x256xf32> -> vector<256x4xf32>
    %cst = arith.constant dense<0.000000e+00> : vector<256x256xf32>
    %10 = tpu.matmul %9, %7, %cst {dimension_numbers = #tpu.dot_dimension_numbers<[1], [0], [0], [1], [0, 0, 1, 1], [], []>} : vector<256x4xf32>, vector<4x256xf32>, vector<256x256xf32> -> vector<256x256xf32>
    %cst_3 = arith.constant dense<0xFF800000> : vector<256xf32>
    %11 = vector.multi_reduction <maximumf>, %10, %cst_3 [1] : vector<256x256xf32> to vector<256xf32>
    %12 = vector.shape_cast %11 : vector<256xf32> to vector<256x1xf32>
    %13 = vector.broadcast %12 : vector<256x1xf32> to vector<256x256xf32>
    %14 = arith.subf %10, %13 : vector<256x256xf32>
    %15 = math.exp %14 : vector<256x256xf32>
    %cst_4 = arith.constant dense<0.000000e+00> : vector<256xf32>
    %16 = vector.multi_reduction <add>, %15, %cst_4 [1] : vector<256x256xf32> to vector<256xf32>
    %17 = vector.shape_cast %16 : vector<256xf32> to vector<256x1xf32>
    %cst_5 = arith.constant dense<0.000000e+00> : vector<4x256xf32>
    %18 = tpu.matmul %8, %15, %cst_5 {dimension_numbers = #tpu.dot_dimension_numbers<[1], [1], [0], [0], [0, 0, 1, 0], [], []>} : vector<4x256xf32>, vector<256x256xf32>, vector<4x256xf32> -> vector<4x256xf32>
    %19 = tpu.reciprocal %17 {approx = true} : vector<256x1xf32> -> vector<256x1xf32>
    %20 = tpu.transpose %19, [1, 0] : vector<256x1xf32> -> vector<1x256xf32>
    %21 = vector.broadcast %20 : vector<1x256xf32> to vector<4x256xf32>
    %22 = arith.mulf %18, %21 : vector<4x256xf32>
    %c0_6 = arith.constant 0 : index
    %c0_7 = arith.constant 0 : index
    %23 = vector.load %arg5[%c0_6, %c0_7] : memref<4x4xf32, #tpu.memory_space<vmem>>, vector<4x4xf32>
    %cst_8 = arith.constant dense<0.000000e+00> : vector<4x256xf32>
    %24 = tpu.matmul %23, %22, %cst_8 {dimension_numbers = #tpu.dot_dimension_numbers<[1], [0], [0], [1], [0, 0, 1, 1], [], []>} : vector<4x4xf32>, vector<4x256xf32>, vector<4x256xf32> -> vector<4x256xf32>
    %c0_9 = arith.constant 0 : index
    %c0_10 = arith.constant 0 : index
    %25 = vector.load %arg6[%c0_9, %c0_10] : memref<4x1xf32, #tpu.memory_space<vmem>>, vector<4x1xf32>
    %26 = vector.broadcast %25 : vector<4x1xf32> to vector<4x256xf32>
    %27 = arith.addf %24, %26 : vector<4x256xf32>
    %c0_11 = arith.constant 0 : index
    %c0_12 = arith.constant 0 : index
    %28 = arith.index_cast %4 : i32 to index
    %29 = vector.load %arg2[%c0_11, %c0_12, %28] : memref<1x4x256xf32, #tpu.memory_space<vmem>>, vector<1x4x256xf32>
    %30 = vector.shape_cast %29 : vector<1x4x256xf32> to vector<4x256xf32>
    %31 = arith.addf %27, %30 : vector<4x256xf32>
    %c0_13 = arith.constant 0 : index
    %c0_14 = arith.constant 0 : index
    %c0_15 = arith.constant 0 : index
    %32 = vector.load %arg7[%c0_13, %c0_14, %c0_15] : memref<1x4x256xf32, #tpu.memory_space<vmem>>, vector<1x4x256xf32>
    %33 = vector.shape_cast %32 : vector<1x4x256xf32> to vector<4x256xf32>
    %34 = vector.shape_cast %31 : vector<4x256xf32> to vector<1x4x256xf32>
    tpu.vector_store %arg7[%c0_13, %c0_14, %c0_15], %34 {strides = array<i32>} : memref<1x4x256xf32, #tpu.memory_space<vmem>>, vector<1x4x256xf32>,
    return
  }
  func.func @transform_0(%arg0: i32, %arg1: i32) -> (i32, i32, i32) {
    %c0_i32 = arith.constant 0 : i32
    %c0_i32_0 = arith.constant 0 : i32
    %c0_i32_1 = arith.constant 0 : i32
    return %arg0, %c0_i32, %c0_i32_0 : i32, i32, i32
  }
  func.func @transform_1(%arg0: i32, %arg1: i32) -> (i32, i32) {
    %c0_i32 = arith.constant 0 : i32
    %c0_i32_0 = arith.constant 0 : i32
    %c0_i32_1 = arith.constant 0 : i32
    return %c0_i32, %c0_i32_0 : i32, i32
  }
  func.func @transform_2(%arg0: i32, %arg1: i32) -> (i32, i32) {
    %c0_i32 = arith.constant 0 : i32
    %c0_i32_0 = arith.constant 0 : i32
    %c0_i32_1 = arith.constant 0 : i32
    return %c0_i32, %c0_i32_0 : i32, i32
  }
  func.func @transform_3(%arg0: i32, %arg1: i32) -> (i32, i32) {
    %c0_i32 = arith.constant 0 : i32
    %c0_i32_0 = arith.constant 0 : i32
    %c0_i32_1 = arith.constant 0 : i32
    return %c0_i32, %c0_i32_0 : i32, i32
  }
  func.func @transform_4(%arg0: i32, %arg1: i32) -> (i32, i32) {
    %c0_i32 = arith.constant 0 : i32
    %c0_i32_0 = arith.constant 0 : i32
    %c0_i32_1 = arith.constant 0 : i32
    return %c0_i32, %c0_i32_0 : i32, i32
  }
  func.func @transform_5(%arg0: i32, %arg1: i32) -> (i32, i32, i32) {
    %c0_i32 = arith.constant 0 : i32
    %c0_i32_0 = arith.constant 0 : i32
    return %arg0, %c0_i32, %arg1 : i32, i32, i32
  }
}

</mosaic_0001>

<llo_original>
// kernel: tpu_custom_call.1
$region0: #{tpu_custom_call.1}
  #allocation0 [shape = 'u32[]', space=smem, size = 0x4, offset = 0x4, fixed_abs, tag = 'smem constant byte address 0x4 - core index']
  #allocation1 [shape = 'u32[72,128]{1,0:T(1,128)}', space=vmem, size = 0x9000, scoped, tag = 'internal scratch']
  #allocation2 [shape = 'f32[12,256]{1,0:T(8,128)}', space=vmem, size = 0x4000, scoped, tag = 'scratch operand']
  %s0 = inlined_call_operand.vmem [shape: f32[2,4,256], index: 0, kind: input, shape index: {}]
  %s1 = inlined_call_operand.vmem [shape: f32[12,4], index: 1, kind: input, shape index: {}]
  %s2 = inlined_call_operand.vmem [shape: f32[12,1], index: 2, kind: input, shape index: {}]
  %s3 = inlined_call_operand.vmem [shape: f32[4,4], index: 3, kind: input, shape index: {}]
  %s4 = inlined_call_operand.vmem [shape: f32[4,1], index: 4, kind: input, shape index: {}]
  %s5 = inlined_call_operand.hbm [shape: f32[2,4,256], index: 5, kind: output, shape index: {}]
  %s6 = sld [smem:[#allocation0]]
  $region57: #{tpu_custom_call.1} parent=0
    _
  %s8 = ssub.s32 1, %s6
  %s9 = scalar_select 0, %s8, %s6
  $region1: #{tpu_custom_call.1} parent=0
    #allocation3 [shape = 'u8[8192]{0}', space=vmem, size = 0x2000, scoped, tag = 'output window, operand 0']
    #allocation4 [shape = 's32[2]{0}', space=sflag, size = 0x8, scoped, tag = 'scoped memory for tpu_custom_call.1']
    %10 = vsyncpa [#allocation4], 0
    %s11 = scalar_lea.sflag [#allocation4], 1
    %12 = vsyncpa %s11, 0
    loop: start=0, step=1, limit=4
    $region2: #{tpu_custom_call.1} parent=1 // loop_pre_header
      _
    $region3: #{tpu_custom_call.1} parent=1 // loop_header
      %s14 = sphi 0, %s18
      %p15 = scmp.ge.s32.totalorder %s14, 4
      %s21 = sphi 0, %s33
      %s22 = sphi 0, %s29
      %s23 = sphi 0, %s21
      %s24 = sphi 0, %s22
      %s25 = sphi 0, %s23
      %s26 = sphi 0, %s24
      %s36 = sphi 0, %s38
      %s39 = sphi 0, %s36
      %s40 = sphi 0, %s39
      %s56 = sphi 0, %s40
      %s60 = sphi 0, %s60
      %s62 = sphi 0, %s60
      %s63 = sphi 0, %s62
      %s77 = sphi 0, %s63
      %s81 = sphi 0, %s81
      %s83 = sphi 0, %s81
      %s84 = sphi 0, %s83
      %s98 = sphi 0, %s84
      %s102 = sphi 0, %s102
      %s104 = sphi 0, %s102
      %s105 = sphi 0, %s104
      %s119 = sphi 0, %s105
      %s123 = sphi 0, %s123
      %s125 = sphi 0, %s123
      %s126 = sphi 0, %s125
      %s140 = sphi 0, %s126
      %s148 = sphi 0, %s150
      %s151 = sphi 0, %s148
      %s152 = sphi 0, %s151
      %s168 = sphi 0, %s152
    $region4: #{tpu_custom_call.1} parent=1 // loop_header_branch
      %17 = sbr.rel (%p15) target = $region8
    $region5: #{tpu_custom_call.1} parent=1 // loop_body
      %s19 = ssub.s32 %s14, 1
      %s20 = ssub.s32 %s14, 2
      %s27 = sadd.s32 1, %s22
      %p28 = scmp.ge.s32.totalorder %s27, 1
      %s29 = scalar_select %p28, 0, %s27
      %s30 = sadd.s32 1, %s21
      %s31 = scalar_select %p28, %s30, %s21
      %p32 = scmp.ge.s32.totalorder %s31, 2
      %s33 = scalar_select %p32, 0, %s31
      %s34 = ssub.s32 %s21, %s33
      %p35 = scmp.eq.s32.totalorder %s34, 0
      %s37 = sadd.s32 %s36, 1
      %s38 = scalar_select %p35, %s36, %s37
      %p41 = pneg %p35
      %p42 = scmp.eq.s32.totalorder %s14, 1
      %p43 = por %p41, %p42
      %p44 = scmp.ne.s32.totalorder %s36, %s39
      %p45 = scmp.eq.s32.totalorder %s14, 0
      %p46 = por %p44, %p45
      %p47 = scmp.ne.s32.totalorder %s36, %s39
      %p48 = scmp.eq.s32.totalorder %s19, 1
      %p49 = por %p47, %p48
      %p50 = scmp.ne.s32.totalorder %s39, %s40
      %p51 = scmp.eq.s32.totalorder %s19, 0
      %p52 = por %p50, %p51
      %p53 = scmp.ne.s32.totalorder %s39, %s40
      %p54 = scmp.eq.s32.totalorder %s20, 1
      %p55 = por %p53, %p54
      %p57 = scmp.ne.s32.totalorder %s40, %s56
      %p58 = scmp.eq.s32.totalorder %s20, 0
      %p59 = por %p57, %p58
      %s61 = sadd.s32 %s60, 1
      %p64 = scmp.eq.s32.totalorder %s14, 1
      %p65 = scmp.ne.s32.totalorder %s60, %s62
      %p66 = scmp.eq.s32.totalorder %s14, 0
      %p67 = por %p65, %p66
      %p68 = scmp.ne.s32.totalorder %s60, %s62
      %p69 = scmp.eq.s32.totalorder %s19, 1
      %p70 = por %p68, %p69
      %p71 = scmp.ne.s32.totalorder %s62, %s63
      %p72 = scmp.eq.s32.totalorder %s19, 0
      %p73 = por %p71, %p72
      %p74 = scmp.ne.s32.totalorder %s62, %s63
      %p75 = scmp.eq.s32.totalorder %s20, 1
      %p76 = por %p74, %p75
      %p78 = scmp.ne.s32.totalorder %s63, %s77
      %p79 = scmp.eq.s32.totalorder %s20, 0
      %p80 = por %p78, %p79
      %s82 = sadd.s32 %s81, 1
      %p85 = scmp.eq.s32.totalorder %s14, 1
      %p86 = scmp.ne.s32.totalorder %s81, %s83
      %p87 = scmp.eq.s32.totalorder %s14, 0
      %p88 = por %p86, %p87
      %p89 = scmp.ne.s32.totalorder %s81, %s83
      %p90 = scmp.eq.s32.totalorder %s19, 1
      %p91 = por %p89, %p90
      %p92 = scmp.ne.s32.totalorder %s83, %s84
      %p93 = scmp.eq.s32.totalorder %s19, 0
      %p94 = por %p92, %p93
      %p95 = scmp.ne.s32.totalorder %s83, %s84
      %p96 = scmp.eq.s32.totalorder %s20, 1
      %p97 = por %p95, %p96
      %p99 = scmp.ne.s32.totalorder %s84, %s98
      %p100 = scmp.eq.s32.totalorder %s20, 0
      %p101 = por %p99, %p100
      %s103 = sadd.s32 %s102, 1
      %p106 = scmp.eq.s32.totalorder %s14, 1
      %p107 = scmp.ne.s32.totalorder %s102, %s104
      %p108 = scmp.eq.s32.totalorder %s14, 0
      %p109 = por %p107, %p108
      %p110 = scmp.ne.s32.totalorder %s102, %s104
      %p111 = scmp.eq.s32.totalorder %s19, 1
      %p112 = por %p110, %p111
      %p113 = scmp.ne.s32.totalorder %s104, %s105
      %p114 = scmp.eq.s32.totalorder %s19, 0
      %p115 = por %p113, %p114
      %p116 = scmp.ne.s32.totalorder %s104, %s105
      %p117 = scmp.eq.s32.totalorder %s20, 1
      %p118 = por %p116, %p117
      %p120 = scmp.ne.s32.totalorder %s105, %s119
      %p121 = scmp.eq.s32.totalorder %s20, 0
      %p122 = por %p120, %p121
      %s124 = sadd.s32 %s123, 1
      %p127 = scmp.eq.s32.totalorder %s14, 1
      %p128 = scmp.ne.s32.totalorder %s123, %s125
      %p129 = scmp.eq.s32.totalorder %s14, 0
      %p130 = por %p128, %p129
      %p131 = scmp.ne.s32.totalorder %s123, %s125
      %p132 = scmp.eq.s32.totalorder %s19, 1
      %p133 = por %p131, %p132
      %p134 = scmp.ne.s32.totalorder %s125, %s126
      %p135 = scmp.eq.s32.totalorder %s19, 0
      %p136 = por %p134, %p135
      %p137 = scmp.ne.s32.totalorder %s125, %s126
      %p138 = scmp.eq.s32.totalorder %s20, 1
      %p139 = por %p137, %p138
      %p141 = scmp.ne.s32.totalorder %s126, %s140
      %p142 = scmp.eq.s32.totalorder %s20, 0
      %p143 = por %p141, %p142
      %s144 = ssub.s32 %s21, %s33
      %s145 = ssub.s32 %s22, %s29
      %s146 = sor.u32 %s144, %s145
      %p147 = scmp.eq.s32.totalorder %s146, 0
      %s149 = sadd.s32 %s148, 1
      %s150 = scalar_select %p147, %s148, %s149
      %p153 = pneg %p147
      %p154 = scmp.eq.s32.totalorder %s14, 1
      %p155 = por %p153, %p154
      %p156 = scmp.ne.s32.totalorder %s148, %s151
      %p157 = scmp.eq.s32.totalorder %s14, 0
      %p158 = por %p156, %p157
      %p159 = scmp.ne.s32.totalorder %s148, %s151
      %p160 = scmp.eq.s32.totalorder %s19, 1
      %p161 = por %p159, %p160
      %p162 = scmp.ne.s32.totalorder %s151, %s152
      %p163 = scmp.eq.s32.totalorder %s19, 0
      %p164 = por %p162, %p163
      %p165 = scmp.ne.s32.totalorder %s151, %s152
      %p166 = scmp.eq.s32.totalorder %s20, 1
      %p167 = por %p165, %p166
      %p169 = scmp.ne.s32.totalorder %s152, %s168
      %p170 = scmp.eq.s32.totalorder %s20, 0
      %p171 = por %p169, %p170
      %p172 = scmp.le.s32.totalorder 1, %s14
      %p173 = scmp.lt.s32.totalorder %s14, 3
      %p174 = pnand %p172, %p173
      %p175 = pneg %p174
      // Predicated region
      $region9: #{tpu_custom_call.1} parent=5 // pred_check
        _
      $region10: #{tpu_custom_call.1} parent=5 // pred_check_branch
        %177 = sbr.rel (%p174) target = $region12
      $region11: #{tpu_custom_call.1} parent=5 // pred_region
        %s178 = ssub.s32 %s14, 1
        // Predicated region
        $region13: #{tpu_custom_call.1} parent=11 // pred_check
          %p179 = pneg %p73
        $region14: #{tpu_custom_call.1} parent=11 // pred_check_branch
          %181 = sbr.rel (%p179) target = $region16
        $region15: #{tpu_custom_call.1} parent=11 // pred_region
          _
        $region16: #{tpu_custom_call.1} parent=11 // pred_fallthru
          _
        // Predicated region
        $region17: #{tpu_custom_call.1} parent=11 // pred_check
          %p182 = pneg %p94
        $region18: #{tpu_custom_call.1} parent=11 // pred_check_branch
          %184 = sbr.rel (%p182) target = $region20
        $region19: #{tpu_custom_call.1} parent=11 // pred_region
          _
        $region20: #{tpu_custom_call.1} parent=11 // pred_fallthru
          _
        // Predicated region
        $region21: #{tpu_custom_call.1} parent=11 // pred_check
          %p185 = pneg %p115
        $region22: #{tpu_custom_call.1} parent=11 // pred_check_branch
          %187 = sbr.rel (%p185) target = $region24
        $region23: #{tpu_custom_call.1} parent=11 // pred_region
          _
        $region24: #{tpu_custom_call.1} parent=11 // pred_fallthru
          _
        // Predicated region
        $region25: #{tpu_custom_call.1} parent=11 // pred_check
          %p188 = pneg %p136
        $region26: #{tpu_custom_call.1} parent=11 // pred_check_branch
          %190 = sbr.rel (%p188) target = $region28
        $region27: #{tpu_custom_call.1} parent=11 // pred_region
          _
        $region28: #{tpu_custom_call.1} parent=11 // pred_fallthru
          _
      $region12: #{tpu_custom_call.1} parent=5 // pred_fallthru
        _
      %p191 = scmp.lt.s32.totalorder %s14, 2
      // Predicated region
      $region29: #{tpu_custom_call.1} parent=5 // pred_check
        %p192 = pneg %p191
      $region30: #{tpu_custom_call.1} parent=5 // pred_check_branch
        %194 = sbr.rel (%p192) target = $region32
      $region31: #{tpu_custom_call.1} parent=5 // pred_region
        // Predicated region
        $region33: #{tpu_custom_call.1} parent=31 // pred_check
          %p195 = pneg %p46
        $region34: #{tpu_custom_call.1} parent=31 // pred_check_branch
          %197 = sbr.rel (%p195) target = $region36
        $region35: #{tpu_custom_call.1} parent=31 // pred_region
          %p198 = scmp.lt.s32.totalorder %s21, 1
          %s199 = scalar_select %p198, %s21, 1
          %s200 = smul.addr %s199, 2
          %s201 = smul.addr %s200, 4
          %s202 = scalar_lea.vmem %s0, %s201
        $region36: #{tpu_custom_call.1} parent=31 // pred_fallthru
          _
      $region32: #{tpu_custom_call.1} parent=5 // pred_fallthru
        _
      %p203 = scmp.le.s32.totalorder 1, %s14
      %p204 = scmp.lt.s32.totalorder %s14, 3
      %p205 = pnand %p203, %p204
      %p206 = pneg %p205
      // Predicated region
      $region37: #{tpu_custom_call.1} parent=5 // pred_check
        _
      $region38: #{tpu_custom_call.1} parent=5 // pred_check_branch
        %208 = sbr.rel (%p205) target = $region40
      $region39: #{tpu_custom_call.1} parent=5 // pred_region
        %s209 = ssub.s32 %s14, 1
        %p210 = scmp.lt.s32.totalorder %s23, 1
        %s211 = scalar_select %p210, %s23, 1
        %s212 = smul.addr %s211, 2
        %s213 = smul.addr %s212, 4
        %s214 = scalar_lea.vmem %s0, %s213
        %p215 = pneg %p52
        %p216 = pneg %p49
        %p217 = pneg %p73
        %p218 = pneg %p70
        %p219 = pneg %p94
        %p220 = pneg %p91
        %p221 = pneg %p115
        %p222 = pneg %p112
        %p223 = pneg %p136
        %p224 = pneg %p133
        %p225 = pneg %p164
        %p226 = pneg %p161
        %s227 = sand.u32 %s151, 1
        %s228 = scalar_lea.sflag [#allocation4], %s227
        %s229 = sand.u32 %s151, 1
        %s230 = smul.addr %s229, 8
        %s231 = scalar_lea.vmem [#allocation3], %s230
        %p232 = scmp.lt.s32.totalorder %s23, 1
        %s233 = scalar_select %p232, %s23, 1
        %s234 = smul.addr %s233, 2
        %s235 = smul.addr %s234, 4
        %s236 = scalar_lea.vmem %s0, %s235
        %s237 = smul.u32 2, %s24
        %p238 = scmp.eq.s32.totalorder %s24, 0
        // Predicated region
        $region41: #{tpu_custom_call.1} parent=39 // pred_check
          %p239 = pneg %p238
        $region42: #{tpu_custom_call.1} parent=39 // pred_check_branch
          %241 = sbr.rel (%p239) target = $region44
        $region43: #{tpu_custom_call.1} parent=39 // pred_region
          %v242 = vld [vmem:[%s236] sm:$0xff]
          %v243 = vld [vmem:[%s1] sm:$0xff]
          %v244 = vld [vmem:[%s1 + $0x8] sm:$0xf]
          %v245 = vld [vmem:[%s2] sm:$0xff]
          %v246 = vld [vmem:[%s2 + $0x8] sm:$0xf]
          %248 = vset.pattern.permute.xlu0 0
          %249 = vperm.xlu0 %248, %v245
          %v250 = vpop.permute.xlu0 %249
          %253 = vset.pattern.permute.xlu0 0
          %254 = vperm.xlu0 %253, %v246
          %v255 = vpop.permute.xlu0 %254
          %258 = vst [vmem:[#allocation1] ss:$2 sm:$0xff] %v242
          %v259 = vld.sshfl [vmem:[#allocation1] sm:$0xff pattern:$0x75316420]
          %v260 = vld.sshfl [vmem:[#allocation1 + $0x8] sm:$0xff pattern:$0x75316420]
          %vm261 = vcmask 31744
          %v263 = vsel %vm261, %v243, 0
          %v266 = vsel %vm261, %v244, 0
          %vm268 = vcmask 1043456
          %v269 = vsel %vm268, %v259, 0
          %v271 = vsel %vm268, %v260, 0
          %273 = vmatpush.msra.mxu0 0.0
          %274 = vmatpush.msra.mxu0 0.0
          %275 = vmatpush.msra.mxu0 0.0
          %276 = vmatpush.msra.mxu0 0.0
          %277 = vmatpush.msra.mxu0 0.0
          %278 = vmatpush.msra.mxu0 0.0
          %279 = vmatpush.msra.mxu0 0.0
          %280 = vmatpush.msra.mxu0 0.0
          %281 = vmatpush.msra.mxu0 0.0
          %282 = vmatpush.msra.mxu0 0.0
          %283 = vmatpush.msra.mxu0 0.0
          %284 = vmatpush.msra.mxu0 0.0
          %285 = vmatpush.msra.mxu0 0.0
          %286 = vmatpush.msra.mxu0 0.0
          %287 = vmatpush.msra.mxu0 0.0
          %288 = vmatpush.msra.mxu0 %v269
          %289 = vmatmul.f32.gmra.mxu0 %v263
          %v290 = vpop.f32.mrf.mxu0
          %v291 = vadd.f32 %v250, %v290
          %292 = vmatmul.f32.gmra.mxu0 %v266
          %v293 = vpop.f32.mrf.mxu0
          %v294 = vadd.f32 %v255, %v293
          %295 = vdwg.mxu0
          %296 = vmatpush.msra.mxu0 0.0
          %297 = vmatpush.msra.mxu0 0.0
          %298 = vmatpush.msra.mxu0 0.0
          %299 = vmatpush.msra.mxu0 0.0
          %300 = vmatpush.msra.mxu0 0.0
          %301 = vmatpush.msra.mxu0 0.0
          %302 = vmatpush.msra.mxu0 0.0
          %303 = vmatpush.msra.mxu0 0.0
          %304 = vmatpush.msra.mxu0 0.0
          %305 = vmatpush.msra.mxu0 0.0
          %306 = vmatpush.msra.mxu0 0.0
          %307 = vmatpush.msra.mxu0 0.0
          %308 = vmatpush.msra.mxu0 0.0
          %309 = vmatpush.msra.mxu0 0.0
          %310 = vmatpush.msra.mxu0 0.0
          %311 = vmatpush.msra.mxu0 %v271
          %312 = vmatmul.f32.gmra.mxu0 %v263
          %v313 = vpop.f32.mrf.mxu0
          %v314 = vadd.f32 %v250, %v313
          %315 = vmatmul.f32.gmra.mxu0 %v266
          %v316 = vpop.f32.mrf.mxu0
          %v317 = vadd.f32 %v255, %v316
          %318 = vdwg.mxu0
          %319 = vst [vmem:[#allocation2] sm:$0xff] %v291
          %320 = vst [vmem:[#allocation2 + $0x8] sm:$0xff] %v314
          %321 = vst [vmem:[#allocation2 + $0x10] sm:$0xf] %v294
          %322 = vst [vmem:[#allocation2 + $0x18] sm:$0xf] %v317
        $region44: #{tpu_custom_call.1} parent=39 // pred_fallthru
          _
        %s323 = smul.u32 %s24, 256
        %s324 = sshra.s32 %s323, 7
        %s325 = sand.u32 %s323, 127
        %s326 = smul.addr %s324, 8
        %s327 = scalar_lea.vmem [#allocation2], %s326
        %v328 = vld [vmem:[%s327] sm:$0xf]
        %v329 = vld [vmem:[%s327 + $0x8] sm:$0xf]
        %v330 = vld [vmem:[#allocation2] sm:$0xf0]
        %v331 = vld [vmem:[#allocation2 + $0x8] sm:$0xf0]
        %v332 = vld [vmem:[#allocation2 + $0x10] sm:$0xf]
        %v333 = vld [vmem:[#allocation2 + $0x18] sm:$0xf]
        %334 = vxpose.xlu0.b32.start [1/16] %v328, 128
        %335 = vxpose.xlu0.b32.cont [2/16] 0.0, 128
        %336 = vxpose.xlu0.b32.cont [3/16] 0.0, 128
        %337 = vxpose.xlu0.b32.cont [4/16] 0.0, 128
        %338 = vxpose.xlu0.b32.cont [5/16] 0.0, 128
        %339 = vxpose.xlu0.b32.cont [6/16] 0.0, 128
        %340 = vxpose.xlu0.b32.cont [7/16] 0.0, 128
        %341 = vxpose.xlu0.b32.cont [8/16] 0.0, 128
        %342 = vxpose.xlu0.b32.cont [9/16] 0.0, 128
        %343 = vxpose.xlu0.b32.cont [10/16] 0.0, 128
        %344 = vxpose.xlu0.b32.cont [11/16] 0.0, 128
        %345 = vxpose.xlu0.b32.cont [12/16] 0.0, 128
        %346 = vxpose.xlu0.b32.cont [13/16] 0.0, 128
        %347 = vxpose.xlu0.b32.cont [14/16] 0.0, 128
        %348 = vxpose.xlu0.b32.cont [15/16] 0.0, 128
        %349 = vxpose.xlu0.b32.end [16/16] 0.0, 128
        %v350 = vpop.trf.xlu0
        %v351 = vpop.trf.xlu0
        %v352 = vpop.trf.xlu0
        %v353 = vpop.trf.xlu0
        %v354 = vpop.trf.xlu0
        %v355 = vpop.trf.xlu0
        %v356 = vpop.trf.xlu0
        %v357 = vpop.trf.xlu0
        %v358 = vpop.trf.xlu0
        %v359 = vpop.trf.xlu0
        %v360 = vpop.trf.xlu0
        %v361 = vpop.trf.xlu0
        %v362 = vpop.trf.xlu0
        %v363 = vpop.trf.xlu0
        %v364 = vpop.trf.xlu0
        %v365 = vpop.trf.xlu0
        %366 = vxpose.xlu0.b32.start [1/16] %v329, 128
        %367 = vxpose.xlu0.b32.cont [2/16] 0.0, 128
        %368 = vxpose.xlu0.b32.cont [3/16] 0.0, 128
        %369 = vxpose.xlu0.b32.cont [4/16] 0.0, 128
        %370 = vxpose.xlu0.b32.cont [5/16] 0.0, 128
        %371 = vxpose.xlu0.b32.cont [6/16] 0.0, 128
        %372 = vxpose.xlu0.b32.cont [7/16] 0.0, 128
        %373 = vxpose.xlu0.b32.cont [8/16] 0.0, 128
        %374 = vxpose.xlu0.b32.cont [9/16] 0.0, 128
        %375 = vxpose.xlu0.b32.cont [10/16] 0.0, 128
        %376 = vxpose.xlu0.b32.cont [11/16] 0.0, 128
        %377 = vxpose.xlu0.b32.cont [12/16] 0.0, 128
        %378 = vxpose.xlu0.b32.cont [13/16] 0.0, 128
        %379 = vxpose.xlu0.b32.cont [14/16] 0.0, 128
        %380 = vxpose.xlu0.b32.cont [15/16] 0.0, 128
        %381 = vxpose.xlu0.b32.end [16/16] 0.0, 128
        %v382 = vpop.trf.xlu0
        %v383 = vpop.trf.xlu0
        %v384 = vpop.trf.xlu0
        %v385 = vpop.trf.xlu0
        %v386 = vpop.trf.xlu0
        %v387 = vpop.trf.xlu0
        %v388 = vpop.trf.xlu0
        %v389 = vpop.trf.xlu0
        %v390 = vpop.trf.xlu0
        %v391 = vpop.trf.xlu0
        %v392 = vpop.trf.xlu0
        %v393 = vpop.trf.xlu0
        %v394 = vpop.trf.xlu0
        %v395 = vpop.trf.xlu0
        %v396 = vpop.trf.xlu0
        %v397 = vpop.trf.xlu0
        %v400 = vrot.slane %v330, 4
        %v401 = vrot.slane %v331, 4
        %vm402 = vcmask 31744
        %v404 = vsel %vm402, %v350, 0
        %v407 = vsel %vm402, %v351, 0
        %v410 = vsel %vm402, %v352, 0
        %v413 = vsel %vm402, %v353, 0
        %v416 = vsel %vm402, %v354, 0
        %v419 = vsel %vm402, %v355, 0
        %v422 = vsel %vm402, %v356, 0
        %v425 = vsel %vm402, %v357, 0
        %v428 = vsel %vm402, %v358, 0
        %v431 = vsel %vm402, %v359, 0
        %v434 = vsel %vm402, %v360, 0
        %v437 = vsel %vm402, %v361, 0
        %v440 = vsel %vm402, %v362, 0
        %v443 = vsel %vm402, %v363, 0
        %v446 = vsel %vm402, %v364, 0
        %v449 = vsel %vm402, %v365, 0
        %v452 = vsel %vm402, %v382, 0
        %v455 = vsel %vm402, %v383, 0
        %v458 = vsel %vm402, %v384, 0
        %v461 = vsel %vm402, %v385, 0
        %v464 = vsel %vm402, %v386, 0
        %v467 = vsel %vm402, %v387, 0
        %v470 = vsel %vm402, %v388, 0
        %v473 = vsel %vm402, %v389, 0
        %v476 = vsel %vm402, %v390, 0
        %v479 = vsel %vm402, %v391, 0
        %v482 = vsel %vm402, %v392, 0
        %v485 = vsel %vm402, %v393, 0
        %v488 = vsel %vm402, %v394, 0
        %v491 = vsel %vm402, %v395, 0
        %v494 = vsel %vm402, %v396, 0
        %v497 = vsel %vm402, %v397, 0
        %vm499 = vcmask 1043456
        %v500 = vsel %vm499, %v400, 0
        %v502 = vsel %vm499, %v401, 0
        %504 = vmatpush.msra.mxu0 0.0
        %505 = vmatpush.msra.mxu0 0.0
        %506 = vmatpush.msra.mxu0 0.0
        %507 = vmatpush.msra.mxu0 0.0
        %508 = vmatpush.msra.mxu0 0.0
        %509 = vmatpush.msra.mxu0 0.0
        %510 = vmatpush.msra.mxu0 0.0
        %511 = vmatpush.msra.mxu0 0.0
        %512 = vmatpush.msra.mxu0 0.0
        %513 = vmatpush.msra.mxu0 0.0
        %514 = vmatpush.msra.mxu0 0.0
        %515 = vmatpush.msra.mxu0 0.0
        %516 = vmatpush.msra.mxu0 0.0
        %517 = vmatpush.msra.mxu0 0.0
        %518 = vmatpush.msra.mxu0 0.0
        %519 = vmatpush.msra.mxu0 %v500
        %520 = vmatmul.f32.gmra.mxu0 %v404
        %v521 = vpop.f32.mrf.mxu0
        %v522 = vadd.f32 0.0, %v521
        %523 = vmatmul.f32.gmra.mxu0 %v407
        %v524 = vpop.f32.mrf.mxu0
        %v525 = vadd.f32 0.0, %v524
        %526 = vmatmul.f32.gmra.mxu0 %v410
        %v527 = vpop.f32.mrf.mxu0
        %v528 = vadd.f32 0.0, %v527
        %529 = vmatmul.f32.gmra.mxu0 %v413
        %v530 = vpop.f32.mrf.mxu0
        %v531 = vadd.f32 0.0, %v530
        %532 = vmatmul.f32.gmra.mxu0 %v416
        %v533 = vpop.f32.mrf.mxu0
        %v534 = vadd.f32 0.0, %v533
        %535 = vmatmul.f32.gmra.mxu0 %v419
        %v536 = vpop.f32.mrf.mxu0
        %v537 = vadd.f32 0.0, %v536
        %538 = vmatmul.f32.gmra.mxu0 %v422
        %v539 = vpop.f32.mrf.mxu0
        %v540 = vadd.f32 0.0, %v539
        %541 = vmatmul.f32.gmra.mxu0 %v425
        %v542 = vpop.f32.mrf.mxu0
        %v543 = vadd.f32 0.0, %v542
        %544 = vmatmul.f32.gmra.mxu0 %v428
        %v545 = vpop.f32.mrf.mxu0
        %v546 = vadd.f32 0.0, %v545
        %547 = vmatmul.f32.gmra.mxu0 %v431
        %v548 = vpop.f32.mrf.mxu0
        %v549 = vadd.f32 0.0, %v548
        %550 = vmatmul.f32.gmra.mxu0 %v434
        %v551 = vpop.f32.mrf.mxu0
        %v552 = vadd.f32 0.0, %v551
        %553 = vmatmul.f32.gmra.mxu0 %v437
        %v554 = vpop.f32.mrf.mxu0
        %v555 = vadd.f32 0.0, %v554
        %556 = vmatmul.f32.gmra.mxu0 %v440
        %v557 = vpop.f32.mrf.mxu0
        %v558 = vadd.f32 0.0, %v557
        %559 = vmatmul.f32.gmra.mxu0 %v443
        %v560 = vpop.f32.mrf.mxu0
        %v561 = vadd.f32 0.0, %v560
        %562 = vmatmul.f32.gmra.mxu0 %v446
        %v563 = vpop.f32.mrf.mxu0
        %v564 = vadd.f32 0.0, %v563
        %565 = vmatmul.f32.gmra.mxu0 %v449
        %v566 = vpop.f32.mrf.mxu0
        %v567 = vadd.f32 0.0, %v566
        %568 = vmatmul.f32.gmra.mxu0 %v452
        %v569 = vpop.f32.mrf.mxu0
        %v570 = vadd.f32 0.0, %v569
        %571 = vmatmul.f32.gmra.mxu0 %v455
        %v572 = vpop.f32.mrf.mxu0
        %v573 = vadd.f32 0.0, %v572
        %574 = vmatmul.f32.gmra.mxu0 %v458
        %v575 = vpop.f32.mrf.mxu0
        %v576 = vadd.f32 0.0, %v575
        %577 = vmatmul.f32.gmra.mxu0 %v461
        %v578 = vpop.f32.mrf.mxu0
        %v579 = vadd.f32 0.0, %v578
        %580 = vmatmul.f32.gmra.mxu0 %v464
        %v581 = vpop.f32.mrf.mxu0
        %v582 = vadd.f32 0.0, %v581
        %583 = vmatmul.f32.gmra.mxu0 %v467
        %v584 = vpop.f32.mrf.mxu0
        %v585 = vadd.f32 0.0, %v584
        %586 = vmatmul.f32.gmra.mxu0 %v470
        %v587 = vpop.f32.mrf.mxu0
        %v588 = vadd.f32 0.0, %v587
        %589 = vmatmul.f32.gmra.mxu0 %v473
        %v590 = vpop.f32.mrf.mxu0
        %v591 = vadd.f32 0.0, %v590
        %592 = vmatmul.f32.gmra.mxu0 %v476
        %v593 = vpop.f32.mrf.mxu0
        %v594 = vadd.f32 0.0, %v593
        %595 = vmatmul.f32.gmra.mxu0 %v479
        %v596 = vpop.f32.mrf.mxu0
        %v597 = vadd.f32 0.0, %v596
        %598 = vmatmul.f32.gmra.mxu0 %v482
        %v599 = vpop.f32.mrf.mxu0
        %v600 = vadd.f32 0.0, %v599
        %601 = vmatmul.f32.gmra.mxu0 %v485
        %v602 = vpop.f32.mrf.mxu0
        %v603 = vadd.f32 0.0, %v602
        %604 = vmatmul.f32.gmra.mxu0 %v488
        %v605 = vpop.f32.mrf.mxu0
        %v606 = vadd.f32 0.0, %v605
        %607 = vmatmul.f32.gmra.mxu0 %v491
        %v608 = vpop.f32.mrf.mxu0
        %v609 = vadd.f32 0.0, %v608
        %610 = vmatmul.f32.gmra.mxu0 %v494
        %v611 = vpop.f32.mrf.mxu0
        %v612 = vadd.f32 0.0, %v611
        %613 = vmatmul.f32.gmra.mxu0 %v497
        %v614 = vpop.f32.mrf.mxu0
        %v615 = vadd.f32 0.0, %v614
        %616 = vdwg.mxu0
        %617 = vmatpush.msra.mxu0 0.0
        %618 = vmatpush.msra.mxu0 0.0
        %619 = vmatpush.msra.mxu0 0.0
        %620 = vmatpush.msra.mxu0 0.0
        %621 = vmatpush.msra.mxu0 0.0
        %622 = vmatpush.msra.mxu0 0.0
        %623 = vmatpush.msra.mxu0 0.0
        %624 = vmatpush.msra.mxu0 0.0
        %625 = vmatpush.msra.mxu0 0.0
        %626 = vmatpush.msra.mxu0 0.0
        %627 = vmatpush.msra.mxu0 0.0
        %628 = vmatpush.msra.mxu0 0.0
        %629 = vmatpush.msra.mxu0 0.0
        %630 = vmatpush.msra.mxu0 0.0
        %631 = vmatpush.msra.mxu0 0.0
        %632 = vmatpush.msra.mxu0 %v502
        %633 = vmatmul.f32.gmra.mxu0 %v404
        %v634 = vpop.f32.mrf.mxu0
        %v635 = vadd.f32 0.0, %v634
        %636 = vmatmul.f32.gmra.mxu0 %v407
        %v637 = vpop.f32.mrf.mxu0
        %v638 = vadd.f32 0.0, %v637
        %639 = vmatmul.f32.gmra.mxu0 %v410
        %v640 = vpop.f32.mrf.mxu0
        %v641 = vadd.f32 0.0, %v640
        %642 = vmatmul.f32.gmra.mxu0 %v413
        %v643 = vpop.f32.mrf.mxu0
        %v644 = vadd.f32 0.0, %v643
        %645 = vmatmul.f32.gmra.mxu0 %v416
        %v646 = vpop.f32.mrf.mxu0
        %v647 = vadd.f32 0.0, %v646
        %648 = vmatmul.f32.gmra.mxu0 %v419
        %v649 = vpop.f32.mrf.mxu0
        %v650 = vadd.f32 0.0, %v649
        %651 = vmatmul.f32.gmra.mxu0 %v422
        %v652 = vpop.f32.mrf.mxu0
        %v653 = vadd.f32 0.0, %v652
        %654 = vmatmul.f32.gmra.mxu0 %v425
        %v655 = vpop.f32.mrf.mxu0
        %v656 = vadd.f32 0.0, %v655
        %657 = vmatmul.f32.gmra.mxu0 %v428
        %v658 = vpop.f32.mrf.mxu0
        %v659 = vadd.f32 0.0, %v658
        %660 = vmatmul.f32.gmra.mxu0 %v431
        %v661 = vpop.f32.mrf.mxu0
        %v662 = vadd.f32 0.0, %v661
        %663 = vmatmul.f32.gmra.mxu0 %v434
        %v664 = vpop.f32.mrf.mxu0
        %v665 = vadd.f32 0.0, %v664
        %666 = vmatmul.f32.gmra.mxu0 %v437
        %v667 = vpop.f32.mrf.mxu0
        %v668 = vadd.f32 0.0, %v667
        %669 = vmatmul.f32.gmra.mxu0 %v440
        %v670 = vpop.f32.mrf.mxu0
        %v671 = vadd.f32 0.0, %v670
        %672 = vmatmul.f32.gmra.mxu0 %v443
        %v673 = vpop.f32.mrf.mxu0
        %v674 = vadd.f32 0.0, %v673
        %675 = vmatmul.f32.gmra.mxu0 %v446
        %v676 = vpop.f32.mrf.mxu0
        %v677 = vadd.f32 0.0, %v676
        %678 = vmatmul.f32.gmra.mxu0 %v449
        %v679 = vpop.f32.mrf.mxu0
        %v680 = vadd.f32 0.0, %v679
        %681 = vmatmul.f32.gmra.mxu0 %v452
        %v682 = vpop.f32.mrf.mxu0
        %v683 = vadd.f32 0.0, %v682
        %684 = vmatmul.f32.gmra.mxu0 %v455
        %v685 = vpop.f32.mrf.mxu0
        %v686 = vadd.f32 0.0, %v685
        %687 = vmatmul.f32.gmra.mxu0 %v458
        %v688 = vpop.f32.mrf.mxu0
        %v689 = vadd.f32 0.0, %v688
        %690 = vmatmul.f32.gmra.mxu0 %v461
        %v691 = vpop.f32.mrf.mxu0
        %v692 = vadd.f32 0.0, %v691
        %693 = vmatmul.f32.gmra.mxu0 %v464
        %v694 = vpop.f32.mrf.mxu0
        %v695 = vadd.f32 0.0, %v694
        %696 = vmatmul.f32.gmra.mxu0 %v467
        %v697 = vpop.f32.mrf.mxu0
        %v698 = vadd.f32 0.0, %v697
        %699 = vmatmul.f32.gmra.mxu0 %v470
        %v700 = vpop.f32.mrf.mxu0
        %v701 = vadd.f32 0.0, %v700
        %702 = vmatmul.f32.gmra.mxu0 %v473
        %v703 = vpop.f32.mrf.mxu0
        %v704 = vadd.f32 0.0, %v703
        %705 = vmatmul.f32.gmra.mxu0 %v476
        %v706 = vpop.f32.mrf.mxu0
        %v707 = vadd.f32 0.0, %v706
        %708 = vmatmul.f32.gmra.mxu0 %v479
        %v709 = vpop.f32.mrf.mxu0
        %v710 = vadd.f32 0.0, %v709
        %711 = vmatmul.f32.gmra.mxu0 %v482
        %v712 = vpop.f32.mrf.mxu0
        %v713 = vadd.f32 0.0, %v712
        %714 = vmatmul.f32.gmra.mxu0 %v485
        %v715 = vpop.f32.mrf.mxu0
        %v716 = vadd.f32 0.0, %v715
        %717 = vmatmul.f32.gmra.mxu0 %v488
        %v718 = vpop.f32.mrf.mxu0
        %v719 = vadd.f32 0.0, %v718
        %720 = vmatmul.f32.gmra.mxu0 %v491
        %v721 = vpop.f32.mrf.mxu0
        %v722 = vadd.f32 0.0, %v721
        %723 = vmatmul.f32.gmra.mxu0 %v494
        %v724 = vpop.f32.mrf.mxu0
        %v725 = vadd.f32 0.0, %v724
        %726 = vmatmul.f32.gmra.mxu0 %v497
        %v727 = vpop.f32.mrf.mxu0
        %v728 = vadd.f32 0.0, %v727
        %729 = vdwg.mxu0
        %v730 = vmax.f32 %v522, %v635
        %731 = vmax.xlane.f32.xlu0 %v730
        %v732 = vpop.xlane.xlu0 %731
        %v733 = vmax.f32 %v525, %v638
        %734 = vmax.xlane.f32.xlu0 %v733
        %v735 = vpop.xlane.xlu0 %734
        %v736 = vmax.f32 %v528, %v641
        %737 = vmax.xlane.f32.xlu0 %v736
        %v738 = vpop.xlane.xlu0 %737
        %v739 = vmax.f32 %v531, %v644
        %740 = vmax.xlane.f32.xlu0 %v739
        %v741 = vpop.xlane.xlu0 %740
        %v742 = vmax.f32 %v534, %v647
        %743 = vmax.xlane.f32.xlu0 %v742
        %v744 = vpop.xlane.xlu0 %743
        %v745 = vmax.f32 %v537, %v650
        %746 = vmax.xlane.f32.xlu0 %v745
        %v747 = vpop.xlane.xlu0 %746
        %v748 = vmax.f32 %v540, %v653
        %749 = vmax.xlane.f32.xlu0 %v748
        %v750 = vpop.xlane.xlu0 %749
        %v751 = vmax.f32 %v543, %v656
        %752 = vmax.xlane.f32.xlu0 %v751
        %v753 = vpop.xlane.xlu0 %752
        %v754 = vmax.f32 %v546, %v659
        %755 = vmax.xlane.f32.xlu0 %v754
        %v756 = vpop.xlane.xlu0 %755
        %v757 = vmax.f32 %v549, %v662
        %758 = vmax.xlane.f32.xlu0 %v757
        %v759 = vpop.xlane.xlu0 %758
        %v760 = vmax.f32 %v552, %v665
        %761 = vmax.xlane.f32.xlu0 %v760
        %v762 = vpop.xlane.xlu0 %761
        %v763 = vmax.f32 %v555, %v668
        %764 = vmax.xlane.f32.xlu0 %v763
        %v765 = vpop.xlane.xlu0 %764
        %v766 = vmax.f32 %v558, %v671
        %767 = vmax.xlane.f32.xlu0 %v766
        %v768 = vpop.xlane.xlu0 %767
        %v769 = vmax.f32 %v561, %v674
        %770 = vmax.xlane.f32.xlu0 %v769
        %v771 = vpop.xlane.xlu0 %770
        %v772 = vmax.f32 %v564, %v677
        %773 = vmax.xlane.f32.xlu0 %v772
        %v774 = vpop.xlane.xlu0 %773
        %v775 = vmax.f32 %v567, %v680
        %776 = vmax.xlane.f32.xlu0 %v775
        %v777 = vpop.xlane.xlu0 %776
        %v778 = vmax.f32 %v570, %v683
        %779 = vmax.xlane.f32.xlu0 %v778
        %v780 = vpop.xlane.xlu0 %779
        %v781 = vmax.f32 %v573, %v686
        %782 = vmax.xlane.f32.xlu0 %v781
        %v783 = vpop.xlane.xlu0 %782
        %v784 = vmax.f32 %v576, %v689
        %785 = vmax.xlane.f32.xlu0 %v784
        %v786 = vpop.xlane.xlu0 %785
        %v787 = vmax.f32 %v579, %v692
        %788 = vmax.xlane.f32.xlu0 %v787
        %v789 = vpop.xlane.xlu0 %788
        %v790 = vmax.f32 %v582, %v695
        %791 = vmax.xlane.f32.xlu0 %v790
        %v792 = vpop.xlane.xlu0 %791
        %v793 = vmax.f32 %v585, %v698
        %794 = vmax.xlane.f32.xlu0 %v793
        %v795 = vpop.xlane.xlu0 %794
        %v796 = vmax.f32 %v588, %v701
        %797 = vmax.xlane.f32.xlu0 %v796
        %v798 = vpop.xlane.xlu0 %797
        %v799 = vmax.f32 %v591, %v704
        %800 = vmax.xlane.f32.xlu0 %v799
        %v801 = vpop.xlane.xlu0 %800
        %v802 = vmax.f32 %v594, %v707
        %803 = vmax.xlane.f32.xlu0 %v802
        %v804 = vpop.xlane.xlu0 %803
        %v805 = vmax.f32 %v597, %v710
        %806 = vmax.xlane.f32.xlu0 %v805
        %v807 = vpop.xlane.xlu0 %806
        %v808 = vmax.f32 %v600, %v713
        %809 = vmax.xlane.f32.xlu0 %v808
        %v810 = vpop.xlane.xlu0 %809
        %v811 = vmax.f32 %v603, %v716
        %812 = vmax.xlane.f32.xlu0 %v811
        %v813 = vpop.xlane.xlu0 %812
        %v814 = vmax.f32 %v606, %v719
        %815 = vmax.xlane.f32.xlu0 %v814
        %v816 = vpop.xlane.xlu0 %815
        %v817 = vmax.f32 %v609, %v722
        %818 = vmax.xlane.f32.xlu0 %v817
        %v819 = vpop.xlane.xlu0 %818
        %v820 = vmax.f32 %v612, %v725
        %821 = vmax.xlane.f32.xlu0 %v820
        %v822 = vpop.xlane.xlu0 %821
        %v823 = vmax.f32 %v615, %v728
        %824 = vmax.xlane.f32.xlu0 %v823
        %v825 = vpop.xlane.xlu0 %824
        %v826 = vsub.f32 %v522, %v732
        %v827 = vsub.f32 %v635, %v732
        %v828 = vsub.f32 %v525, %v735
        %v829 = vsub.f32 %v638, %v735
        %v830 = vsub.f32 %v528, %v738
        %v831 = vsub.f32 %v641, %v738
        %v832 = vsub.f32 %v531, %v741
        %v833 = vsub.f32 %v644, %v741
        %v834 = vsub.f32 %v534, %v744
        %v835 = vsub.f32 %v647, %v744
        %v836 = vsub.f32 %v537, %v747
        %v837 = vsub.f32 %v650, %v747
        %v838 = vsub.f32 %v540, %v750
        %v839 = vsub.f32 %v653, %v750
        %v840 = vsub.f32 %v543, %v753
        %v841 = vsub.f32 %v656, %v753
        %v842 = vsub.f32 %v546, %v756
        %v843 = vsub.f32 %v659, %v756
        %v844 = vsub.f32 %v549, %v759
        %v845 = vsub.f32 %v662, %v759
        %v846 = vsub.f32 %v552, %v762
        %v847 = vsub.f32 %v665, %v762
        %v848 = vsub.f32 %v555, %v765
        %v849 = vsub.f32 %v668, %v765
        %v850 = vsub.f32 %v558, %v768
        %v851 = vsub.f32 %v671, %v768
        %v852 = vsub.f32 %v561, %v771
        %v853 = vsub.f32 %v674, %v771
        %v854 = vsub.f32 %v564, %v774
        %v855 = vsub.f32 %v677, %v774
        %v856 = vsub.f32 %v567, %v777
        %v857 = vsub.f32 %v680, %v777
        %v858 = vsub.f32 %v570, %v780
        %v859 = vsub.f32 %v683, %v780
        %v860 = vsub.f32 %v573, %v783
        %v861 = vsub.f32 %v686, %v783
        %v862 = vsub.f32 %v576, %v786
        %v863 = vsub.f32 %v689, %v786
        %v864 = vsub.f32 %v579, %v789
        %v865 = vsub.f32 %v692, %v789
        %v866 = vsub.f32 %v582, %v792
        %v867 = vsub.f32 %v695, %v792
        %v868 = vsub.f32 %v585, %v795
        %v869 = vsub.f32 %v698, %v795
        %v870 = vsub.f32 %v588, %v798
        %v871 = vsub.f32 %v701, %v798
        %v872 = vsub.f32 %v591, %v801
        %v873 = vsub.f32 %v704, %v801
        %v874 = vsub.f32 %v594, %v804
        %v875 = vsub.f32 %v707, %v804
        %v876 = vsub.f32 %v597, %v807
        %v877 = vsub.f32 %v710, %v807
        %v878 = vsub.f32 %v600, %v810
        %v879 = vsub.f32 %v713, %v810
        %v880 = vsub.f32 %v603, %v813
        %v881 = vsub.f32 %v716, %v813
        %v882 = vsub.f32 %v606, %v816
        %v883 = vsub.f32 %v719, %v816
        %v884 = vsub.f32 %v609, %v819
        %v885 = vsub.f32 %v722, %v819
        %v886 = vsub.f32 %v612, %v822
        %v887 = vsub.f32 %v725, %v822
        %v888 = vsub.f32 %v615, %v825
        %v889 = vsub.f32 %v728, %v825
        %v890 = vmul.f32 %v826, 1.442695
        %v891 = vpow.pop %v890
        %v892 = vmul.f32 %v827, 1.442695
        %v893 = vpow.pop %v892
        %v894 = vmul.f32 %v828, 1.442695
        %v895 = vpow.pop %v894
        %v896 = vmul.f32 %v829, 1.442695
        %v897 = vpow.pop %v896
        %v898 = vmul.f32 %v830, 1.442695
        %v899 = vpow.pop %v898
        %v900 = vmul.f32 %v831, 1.442695
        %v901 = vpow.pop %v900
        %v902 = vmul.f32 %v832, 1.442695
        %v903 = vpow.pop %v902
        %v904 = vmul.f32 %v833, 1.442695
        %v905 = vpow.pop %v904
        %v906 = vmul.f32 %v834, 1.442695
        %v907 = vpow.pop %v906
        %v908 = vmul.f32 %v835, 1.442695
        %v909 = vpow.pop %v908
        %v910 = vmul.f32 %v836, 1.442695
        %v911 = vpow.pop %v910
        %v912 = vmul.f32 %v837, 1.442695
        %v913 = vpow.pop %v912
        %v914 = vmul.f32 %v838, 1.442695
        %v915 = vpow.pop %v914
        %v916 = vmul.f32 %v839, 1.442695
        %v917 = vpow.pop %v916
        %v918 = vmul.f32 %v840, 1.442695
        %v919 = vpow.pop %v918
        %v920 = vmul.f32 %v841, 1.442695
        %v921 = vpow.pop %v920
        %v922 = vmul.f32 %v842, 1.442695
        %v923 = vpow.pop %v922
        %v924 = vmul.f32 %v843, 1.442695
        %v925 = vpow.pop %v924
        %v926 = vmul.f32 %v844, 1.442695
        %v927 = vpow.pop %v926
        %v928 = vmul.f32 %v845, 1.442695
        %v929 = vpow.pop %v928
        %v930 = vmul.f32 %v846, 1.442695
        %v931 = vpow.pop %v930
        %v932 = vmul.f32 %v847, 1.442695
        %v933 = vpow.pop %v932
        %v934 = vmul.f32 %v848, 1.442695
        %v935 = vpow.pop %v934
        %v936 = vmul.f32 %v849, 1.442695
        %v937 = vpow.pop %v936
        %v938 = vmul.f32 %v850, 1.442695
        %v939 = vpow.pop %v938
        %v940 = vmul.f32 %v851, 1.442695
        %v941 = vpow.pop %v940
        %v942 = vmul.f32 %v852, 1.442695
        %v943 = vpow.pop %v942
        %v944 = vmul.f32 %v853, 1.442695
        %v945 = vpow.pop %v944
        %v946 = vmul.f32 %v854, 1.442695
        %v947 = vpow.pop %v946
        %v948 = vmul.f32 %v855, 1.442695
        %v949 = vpow.pop %v948
        %v950 = vmul.f32 %v856, 1.442695
        %v951 = vpow.pop %v950
        %v952 = vmul.f32 %v857, 1.442695
        %v953 = vpow.pop %v952
        %v954 = vmul.f32 %v858, 1.442695
        %v955 = vpow.pop %v954
        %v956 = vmul.f32 %v859, 1.442695
        %v957 = vpow.pop %v956
        %v958 = vmul.f32 %v860, 1.442695
        %v959 = vpow.pop %v958
        %v960 = vmul.f32 %v861, 1.442695
        %v961 = vpow.pop %v960
        %v962 = vmul.f32 %v862, 1.442695
        %v963 = vpow.pop %v962
        %v964 = vmul.f32 %v863, 1.442695
        %v965 = vpow.pop %v964
        %v966 = vmul.f32 %v864, 1.442695
        %v967 = vpow.pop %v966
        %v968 = vmul.f32 %v865, 1.442695
        %v969 = vpow.pop %v968
        %v970 = vmul.f32 %v866, 1.442695
        %v971 = vpow.pop %v970
        %v972 = vmul.f32 %v867, 1.442695
        %v973 = vpow.pop %v972
        %v974 = vmul.f32 %v868, 1.442695
        %v975 = vpow.pop %v974
        %v976 = vmul.f32 %v869, 1.442695
        %v977 = vpow.pop %v976
        %v978 = vmul.f32 %v870, 1.442695
        %v979 = vpow.pop %v978
        %v980 = vmul.f32 %v871, 1.442695
        %v981 = vpow.pop %v980
        %v982 = vmul.f32 %v872, 1.442695
        %v983 = vpow.pop %v982
        %v984 = vmul.f32 %v873, 1.442695
        %v985 = vpow.pop %v984
        %v986 = vmul.f32 %v874, 1.442695
        %v987 = vpow.pop %v986
        %v988 = vmul.f32 %v875, 1.442695
        %v989 = vpow.pop %v988
        %v990 = vmul.f32 %v876, 1.442695
        %v991 = vpow.pop %v990
        %v992 = vmul.f32 %v877, 1.442695
        %v993 = vpow.pop %v992
        %v994 = vmul.f32 %v878, 1.442695
        %v995 = vpow.pop %v994
        %v996 = vmul.f32 %v879, 1.442695
        %v997 = vpow.pop %v996
        %v998 = vmul.f32 %v880, 1.442695
        %v999 = vpow.pop %v998
        %v1000 = vmul.f32 %v881, 1.442695
        %v1001 = vpow.pop %v1000
        %v1002 = vmul.f32 %v882, 1.442695
        %v1003 = vpow.pop %v1002
        %v1004 = vmul.f32 %v883, 1.442695
        %v1005 = vpow.pop %v1004
        %v1006 = vmul.f32 %v884, 1.442695
        %v1007 = vpow.pop %v1006
        %v1008 = vmul.f32 %v885, 1.442695
        %v1009 = vpow.pop %v1008
        %v1010 = vmul.f32 %v886, 1.442695
        %v1011 = vpow.pop %v1010
        %v1012 = vmul.f32 %v887, 1.442695
        %v1013 = vpow.pop %v1012
        %v1014 = vmul.f32 %v888, 1.442695
        %v1015 = vpow.pop %v1014
        %v1016 = vmul.f32 %v889, 1.442695
        %v1017 = vpow.pop %v1016
        %v1018 = vadd.f32 %v891, %v893
        %1019 = vadd.xlane.f32.xlu0 %v1018
        %v1020 = vpop.xlane.xlu0 %1019
        %v1021 = vadd.f32 %v895, %v897
        %1022 = vadd.xlane.f32.xlu0 %v1021
        %v1023 = vpop.xlane.xlu0 %1022
        %v1024 = vadd.f32 %v899, %v901
        %1025 = vadd.xlane.f32.xlu0 %v1024
        %v1026 = vpop.xlane.xlu0 %1025
        %v1027 = vadd.f32 %v903, %v905
        %1028 = vadd.xlane.f32.xlu0 %v1027
        %v1029 = vpop.xlane.xlu0 %1028
        %v1030 = vadd.f32 %v907, %v909
        %1031 = vadd.xlane.f32.xlu0 %v1030
        %v1032 = vpop.xlane.xlu0 %1031
        %v1033 = vadd.f32 %v911, %v913
        %1034 = vadd.xlane.f32.xlu0 %v1033
        %v1035 = vpop.xlane.xlu0 %1034
        %v1036 = vadd.f32 %v915, %v917
        %1037 = vadd.xlane.f32.xlu0 %v1036
        %v1038 = vpop.xlane.xlu0 %1037
        %v1039 = vadd.f32 %v919, %v921
        %1040 = vadd.xlane.f32.xlu0 %v1039
        %v1041 = vpop.xlane.xlu0 %1040
        %v1042 = vadd.f32 %v923, %v925
        %1043 = vadd.xlane.f32.xlu0 %v1042
        %v1044 = vpop.xlane.xlu0 %1043
        %v1045 = vadd.f32 %v927, %v929
        %1046 = vadd.xlane.f32.xlu0 %v1045
        %v1047 = vpop.xlane.xlu0 %1046
        %v1048 = vadd.f32 %v931, %v933
        %1049 = vadd.xlane.f32.xlu0 %v1048
        %v1050 = vpop.xlane.xlu0 %1049
        %v1051 = vadd.f32 %v935, %v937
        %1052 = vadd.xlane.f32.xlu0 %v1051
        %v1053 = vpop.xlane.xlu0 %1052
        %v1054 = vadd.f32 %v939, %v941
        %1055 = vadd.xlane.f32.xlu0 %v1054
        %v1056 = vpop.xlane.xlu0 %1055
        %v1057 = vadd.f32 %v943, %v945
        %1058 = vadd.xlane.f32.xlu0 %v1057
        %v1059 = vpop.xlane.xlu0 %1058
        %v1060 = vadd.f32 %v947, %v949
        %1061 = vadd.xlane.f32.xlu0 %v1060
        %v1062 = vpop.xlane.xlu0 %1061
        %v1063 = vadd.f32 %v951, %v953
        %1064 = vadd.xlane.f32.xlu0 %v1063
        %v1065 = vpop.xlane.xlu0 %1064
        %v1066 = vadd.f32 %v955, %v957
        %1067 = vadd.xlane.f32.xlu0 %v1066
        %v1068 = vpop.xlane.xlu0 %1067
        %v1069 = vadd.f32 %v959, %v961
        %1070 = vadd.xlane.f32.xlu0 %v1069
        %v1071 = vpop.xlane.xlu0 %1070
        %v1072 = vadd.f32 %v963, %v965
        %1073 = vadd.xlane.f32.xlu0 %v1072
        %v1074 = vpop.xlane.xlu0 %1073
        %v1075 = vadd.f32 %v967, %v969
        %1076 = vadd.xlane.f32.xlu0 %v1075
        %v1077 = vpop.xlane.xlu0 %1076
        %v1078 = vadd.f32 %v971, %v973
        %1079 = vadd.xlane.f32.xlu0 %v1078
        %v1080 = vpop.xlane.xlu0 %1079
        %v1081 = vadd.f32 %v975, %v977
        %1082 = vadd.xlane.f32.xlu0 %v1081
        %v1083 = vpop.xlane.xlu0 %1082
        %v1084 = vadd.f32 %v979, %v981
        %1085 = vadd.xlane.f32.xlu0 %v1084
        %v1086 = vpop.xlane.xlu0 %1085
        %v1087 = vadd.f32 %v983, %v985
        %1088 = vadd.xlane.f32.xlu0 %v1087
        %v1089 = vpop.xlane.xlu0 %1088
        %v1090 = vadd.f32 %v987, %v989
        %1091 = vadd.xlane.f32.xlu0 %v1090
        %v1092 = vpop.xlane.xlu0 %1091
        %v1093 = vadd.f32 %v991, %v993
        %1094 = vadd.xlane.f32.xlu0 %v1093
        %v1095 = vpop.xlane.xlu0 %1094
        %v1096 = vadd.f32 %v995, %v997
        %1097 = vadd.xlane.f32.xlu0 %v1096
        %v1098 = vpop.xlane.xlu0 %1097
        %v1099 = vadd.f32 %v999, %v1001
        %1100 = vadd.xlane.f32.xlu0 %v1099
        %v1101 = vpop.xlane.xlu0 %1100
        %v1102 = vadd.f32 %v1003, %v1005
        %1103 = vadd.xlane.f32.xlu0 %v1102
        %v1104 = vpop.xlane.xlu0 %1103
        %v1105 = vadd.f32 %v1007, %v1009
        %1106 = vadd.xlane.f32.xlu0 %v1105
        %v1107 = vpop.xlane.xlu0 %1106
        %v1108 = vadd.f32 %v1011, %v1013
        %1109 = vadd.xlane.f32.xlu0 %v1108
        %v1110 = vpop.xlane.xlu0 %1109
        %v1111 = vadd.f32 %v1015, %v1017
        %1112 = vadd.xlane.f32.xlu0 %v1111
        %v1113 = vpop.xlane.xlu0 %1112
        %1114 = vmatpush.xpose.msra.mxu0 %v951
        %1115 = vmatpush.xpose.msra.mxu0 %v947
        %1116 = vmatpush.xpose.msra.mxu0 %v943
        %1117 = vmatpush.xpose.msra.mxu0 %v939
        %1118 = vmatpush.xpose.msra.mxu0 %v935
        %1119 = vmatpush.xpose.msra.mxu0 %v931
        %1120 = vmatpush.xpose.msra.mxu0 %v927
        %1121 = vmatpush.xpose.msra.mxu0 %v923
        %1122 = vmatpush.xpose.msra.mxu0 %v919
        %1123 = vmatpush.xpose.msra.mxu0 %v915
        %1124 = vmatpush.xpose.msra.mxu0 %v911
        %1125 = vmatpush.xpose.msra.mxu0 %v907
        %1126 = vmatpush.xpose.msra.mxu0 %v903
        %1127 = vmatpush.xpose.msra.mxu0 %v899
        %1128 = vmatpush.xpose.msra.mxu0 %v895
        %1129 = vmatpush.xpose.msra.mxu0 %v891
        %1130 = vmatmul.f32.gmra.mxu0 %v332
        %v1131 = vpop.f32.mrf.mxu0
        %v1132 = vadd.f32 0.0, %v1131
        %1133 = vdwg.mxu0
        %1134 = vmatpush.xpose.msra.mxu0 %v953
        %1135 = vmatpush.xpose.msra.mxu0 %v949
        %1136 = vmatpush.xpose.msra.mxu0 %v945
        %1137 = vmatpush.xpose.msra.mxu0 %v941
        %1138 = vmatpush.xpose.msra.mxu0 %v937
        %1139 = vmatpush.xpose.msra.mxu0 %v933
        %1140 = vmatpush.xpose.msra.mxu0 %v929
        %1141 = vmatpush.xpose.msra.mxu0 %v925
        %1142 = vmatpush.xpose.msra.mxu0 %v921
        %1143 = vmatpush.xpose.msra.mxu0 %v917
        %1144 = vmatpush.xpose.msra.mxu0 %v913
        %1145 = vmatpush.xpose.msra.mxu0 %v909
        %1146 = vmatpush.xpose.msra.mxu0 %v905
        %1147 = vmatpush.xpose.msra.mxu0 %v901
        %1148 = vmatpush.xpose.msra.mxu0 %v897
        %1149 = vmatpush.xpose.msra.mxu0 %v893
        %1150 = vmatmul.f32.gmra.mxu0 %v333
        %v1151 = vpop.f32.mrf.mxu0
        %v1152 = vadd.f32 %v1132, %v1151
        %1153 = vdwg.mxu0
        %1154 = vmatpush.xpose.msra.mxu0 %v1015
        %1155 = vmatpush.xpose.msra.mxu0 %v1011
        %1156 = vmatpush.xpose.msra.mxu0 %v1007
        %1157 = vmatpush.xpose.msra.mxu0 %v1003
        %1158 = vmatpush.xpose.msra.mxu0 %v999
        %1159 = vmatpush.xpose.msra.mxu0 %v995
        %1160 = vmatpush.xpose.msra.mxu0 %v991
        %1161 = vmatpush.xpose.msra.mxu0 %v987
        %1162 = vmatpush.xpose.msra.mxu0 %v983
        %1163 = vmatpush.xpose.msra.mxu0 %v979
        %1164 = vmatpush.xpose.msra.mxu0 %v975
        %1165 = vmatpush.xpose.msra.mxu0 %v971
        %1166 = vmatpush.xpose.msra.mxu0 %v967
        %1167 = vmatpush.xpose.msra.mxu0 %v963
        %1168 = vmatpush.xpose.msra.mxu0 %v959
        %1169 = vmatpush.xpose.msra.mxu0 %v955
        %1170 = vmatmul.f32.gmra.mxu0 %v332
        %v1171 = vpop.f32.mrf.mxu0
        %v1172 = vadd.f32 0.0, %v1171
        %1173 = vdwg.mxu0
        %1174 = vmatpush.xpose.msra.mxu0 %v1017
        %1175 = vmatpush.xpose.msra.mxu0 %v1013
        %1176 = vmatpush.xpose.msra.mxu0 %v1009
        %1177 = vmatpush.xpose.msra.mxu0 %v1005
        %1178 = vmatpush.xpose.msra.mxu0 %v1001
        %1179 = vmatpush.xpose.msra.mxu0 %v997
        %1180 = vmatpush.xpose.msra.mxu0 %v993
        %1181 = vmatpush.xpose.msra.mxu0 %v989
        %1182 = vmatpush.xpose.msra.mxu0 %v985
        %1183 = vmatpush.xpose.msra.mxu0 %v981
        %1184 = vmatpush.xpose.msra.mxu0 %v977
        %1185 = vmatpush.xpose.msra.mxu0 %v973
        %1186 = vmatpush.xpose.msra.mxu0 %v969
        %1187 = vmatpush.xpose.msra.mxu0 %v965
        %1188 = vmatpush.xpose.msra.mxu0 %v961
        %1189 = vmatpush.xpose.msra.mxu0 %v957
        %1190 = vmatmul.f32.gmra.mxu0 %v333
        %v1191 = vpop.f32.mrf.mxu0
        %v1192 = vadd.f32 %v1172, %v1191
        %1193 = vdwg.mxu0
        %v1194 = vrcp.pop %v1020
        %v1195 = vrcp.pop %v1023
        %v1196 = vrcp.pop %v1026
        %v1197 = vrcp.pop %v1029
        %v1198 = vrcp.pop %v1032
        %v1199 = vrcp.pop %v1035
        %v1200 = vrcp.pop %v1038
        %v1201 = vrcp.pop %v1041
        %v1202 = vrcp.pop %v1044
        %v1203 = vrcp.pop %v1047
        %v1204 = vrcp.pop %v1050
        %v1205 = vrcp.pop %v1053
        %v1206 = vrcp.pop %v1056
        %v1207 = vrcp.pop %v1059
        %v1208 = vrcp.pop %v1062
        %v1209 = vrcp.pop %v1065
        %v1210 = vrcp.pop %v1068
        %v1211 = vrcp.pop %v1071
        %v1212 = vrcp.pop %v1074
        %v1213 = vrcp.pop %v1077
        %v1214 = vrcp.pop %v1080
        %v1215 = vrcp.pop %v1083
        %v1216 = vrcp.pop %v1086
        %v1217 = vrcp.pop %v1089
        %v1218 = vrcp.pop %v1092
        %v1219 = vrcp.pop %v1095
        %v1220 = vrcp.pop %v1098
        %v1221 = vrcp.pop %v1101
        %v1222 = vrcp.pop %v1104
        %v1223 = vrcp.pop %v1107
        %v1224 = vrcp.pop %v1110
        %v1225 = vrcp.pop %v1113
        %1226 = vxpose.xlu0.b32.start [1/16] %v1194, 128
        %1227 = vxpose.xlu0.b32.cont [2/16] %v1195, 128
        %1228 = vxpose.xlu0.b32.cont [3/16] %v1196, 128
        %1229 = vxpose.xlu0.b32.cont [4/16] %v1197, 128
        %1230 = vxpose.xlu0.b32.cont [5/16] %v1198, 128
        %1231 = vxpose.xlu0.b32.cont [6/16] %v1199, 128
        %1232 = vxpose.xlu0.b32.cont [7/16] %v1200, 128
        %1233 = vxpose.xlu0.b32.cont [8/16] %v1201, 128
        %1234 = vxpose.xlu0.b32.cont [9/16] %v1202, 128
        %1235 = vxpose.xlu0.b32.cont [10/16] %v1203, 128
        %1236 = vxpose.xlu0.b32.cont [11/16] %v1204, 128
        %1237 = vxpose.xlu0.b32.cont [12/16] %v1205, 128
        %1238 = vxpose.xlu0.b32.cont [13/16] %v1206, 128
        %1239 = vxpose.xlu0.b32.cont [14/16] %v1207, 128
        %1240 = vxpose.xlu0.b32.cont [15/16] %v1208, 128
        %1241 = vxpose.xlu0.b32.end [16/16] %v1209, 128
        %v1242 = vpop.trf.xlu0
        %v1243 = vpop.trf.xlu0
        %v1244 = vpop.trf.xlu0
        %v1245 = vpop.trf.xlu0
        %v1246 = vpop.trf.xlu0
        %v1247 = vpop.trf.xlu0
        %v1248 = vpop.trf.xlu0
        %v1249 = vpop.trf.xlu0
        %v1250 = vpop.trf.xlu0
        %v1251 = vpop.trf.xlu0
        %v1252 = vpop.trf.xlu0
        %v1253 = vpop.trf.xlu0
        %v1254 = vpop.trf.xlu0
        %v1255 = vpop.trf.xlu0
        %v1256 = vpop.trf.xlu0
        %v1257 = vpop.trf.xlu0
        %1258 = vxpose.xlu0.b32.start [1/16] %v1210, 128
        %1259 = vxpose.xlu0.b32.cont [2/16] %v1211, 128
        %1260 = vxpose.xlu0.b32.cont [3/16] %v1212, 128
        %1261 = vxpose.xlu0.b32.cont [4/16] %v1213, 128
        %1262 = vxpose.xlu0.b32.cont [5/16] %v1214, 128
        %1263 = vxpose.xlu0.b32.cont [6/16] %v1215, 128
        %1264 = vxpose.xlu0.b32.cont [7/16] %v1216, 128
        %1265 = vxpose.xlu0.b32.cont [8/16] %v1217, 128
        %1266 = vxpose.xlu0.b32.cont [9/16] %v1218, 128
        %1267 = vxpose.xlu0.b32.cont [10/16] %v1219, 128
        %1268 = vxpose.xlu0.b32.cont [11/16] %v1220, 128
        %1269 = vxpose.xlu0.b32.cont [12/16] %v1221, 128
        %1270 = vxpose.xlu0.b32.cont [13/16] %v1222, 128
        %1271 = vxpose.xlu0.b32.cont [14/16] %v1223, 128
        %1272 = vxpose.xlu0.b32.cont [15/16] %v1224, 128
        %1273 = vxpose.xlu0.b32.end [16/16] %v1225, 128
        %v1274 = vpop.trf.xlu0
        %v1275 = vpop.trf.xlu0
        %v1276 = vpop.trf.xlu0
        %v1277 = vpop.trf.xlu0
        %v1278 = vpop.trf.xlu0
        %v1279 = vpop.trf.xlu0
        %v1280 = vpop.trf.xlu0
        %v1281 = vpop.trf.xlu0
        %v1282 = vpop.trf.xlu0
        %v1283 = vpop.trf.xlu0
        %v1284 = vpop.trf.xlu0
        %v1285 = vpop.trf.xlu0
        %v1286 = vpop.trf.xlu0
        %v1287 = vpop.trf.xlu0
        %v1288 = vpop.trf.xlu0
        %v1289 = vpop.trf.xlu0
        %v1290 = vperm.slane %v1242, 0
        %v1291 = vperm.slane %v1274, 0
        %v1292 = vmul.f32 %v1152, %v1290
        %v1293 = vmul.f32 %v1192, %v1291
        %v1294 = vld [vmem:[%s3] sm:$0xf]
        %v1295 = vld [vmem:[%s4] sm:$0xf]
        %1297 = vset.pattern.permute.xlu0 0
        %1298 = vperm.xlu0 %1297, %v1295
        %v1299 = vpop.permute.xlu0 %1298
        %v1302 = vsel %vm402, %v1294, 0
        %v1305 = vsel %vm499, %v1292, 0
        %v1308 = vsel %vm499, %v1293, 0
        %1310 = vmatpush.msra.mxu0 0.0
        %1311 = vmatpush.msra.mxu0 0.0
        %1312 = vmatpush.msra.mxu0 0.0
        %1313 = vmatpush.msra.mxu0 0.0
        %1314 = vmatpush.msra.mxu0 0.0
        %1315 = vmatpush.msra.mxu0 0.0
        %1316 = vmatpush.msra.mxu0 0.0
        %1317 = vmatpush.msra.mxu0 0.0
        %1318 = vmatpush.msra.mxu0 0.0
        %1319 = vmatpush.msra.mxu0 0.0
        %1320 = vmatpush.msra.mxu0 0.0
        %1321 = vmatpush.msra.mxu0 0.0
        %1322 = vmatpush.msra.mxu0 0.0
        %1323 = vmatpush.msra.mxu0 0.0
        %1324 = vmatpush.msra.mxu0 0.0
        %1325 = vmatpush.msra.mxu0 %v1305
        %1326 = vmatmul.f32.gmra.mxu0 %v1302
        %v1327 = vpop.f32.mrf.mxu0
        %v1328 = vadd.f32 %v1299, %v1327
        %1329 = vdwg.mxu0
        %1330 = vmatpush.msra.mxu0 0.0
        %1331 = vmatpush.msra.mxu0 0.0
        %1332 = vmatpush.msra.mxu0 0.0
        %1333 = vmatpush.msra.mxu0 0.0
        %1334 = vmatpush.msra.mxu0 0.0
        %1335 = vmatpush.msra.mxu0 0.0
        %1336 = vmatpush.msra.mxu0 0.0
        %1337 = vmatpush.msra.mxu0 0.0
        %1338 = vmatpush.msra.mxu0 0.0
        %1339 = vmatpush.msra.mxu0 0.0
        %1340 = vmatpush.msra.mxu0 0.0
        %1341 = vmatpush.msra.mxu0 0.0
        %1342 = vmatpush.msra.mxu0 0.0
        %1343 = vmatpush.msra.mxu0 0.0
        %1344 = vmatpush.msra.mxu0 0.0
        %1345 = vmatpush.msra.mxu0 %v1308
        %1346 = vmatmul.f32.gmra.mxu0 %v1302
        %v1347 = vpop.f32.mrf.mxu0
        %v1348 = vadd.f32 %v1299, %v1347
        %1349 = vdwg.mxu0
        %s1350 = smul.addr %s324, 4
        %s1351 = scalar_lea.vmem %s236, %s1350
        %v1352 = vld [vmem:[%s1351] sm:$0xff]
        %1354 = vst [vmem:[#allocation1] ss:$2 sm:$0xff] %v1352
        %v1355 = vld.sshfl [vmem:[#allocation1] sm:$0xff pattern:$0x75316420]
        %v1356 = vld.sshfl [vmem:[#allocation1 + $0x8] sm:$0xff pattern:$0x75316420]
        %v1359 = vadd.f32 %v1328, %v1355
        %v1360 = vadd.f32 %v1348, %v1356
        %v1363 = vrot.slane %v1360, 4
        %v1364 = vsel %vm499, %v1359, %v1363
        %1366 = vst [vmem:[%s231] sm:$0xff] %v1364
        %s1367 = sand.u32 %s151, 1
        %s1368 = scalar_lea.sflag [#allocation4], %s1367
        %s1369 = sand.u32 %s151, 1
        %s1370 = smul.addr %s1369, 8
        %s1371 = scalar_lea.vmem [#allocation3], %s1370
        // Predicated region
        $region45: #{tpu_custom_call.1} parent=39 // pred_check
          %p1372 = pneg %p161
        $region46: #{tpu_custom_call.1} parent=39 // pred_check_branch
          %1374 = sbr.rel (%p1372) target = $region48
        $region47: #{tpu_custom_call.1} parent=39 // pred_region
          %s1375 = smul.u32 2, %s24
          %1377 = vsyncadd %s1368, 0
          %s1378 = smul.addr %s23, 2
          %s1379 = sadd.s32 %s1375, %s1378
          %s1380 = smul.addr %s1379, 4
          %s1381 = scalar_lea.hbm %s5, %s1380
          %s1383 = sshll.u32 %s1371, 4
          %s1384 = int_to_ptr.vmem [resolvable:$true] %s1383
          %s1385 = sshll.u32 %s1381, 4
          %s1386 = int_to_ptr.hbm [resolvable:$true] %s1385
          %1388 = dma.vmem_to_hbm [thread:$0]  %s1384, 128, %s1386, %s1368
        $region48: #{tpu_custom_call.1} parent=39 // pred_fallthru
          _
      $region40: #{tpu_custom_call.1} parent=5 // pred_fallthru
        _
      %p1389 = scmp.le.s32.totalorder 2, %s14
      // Predicated region
      $region49: #{tpu_custom_call.1} parent=5 // pred_check
        %p1390 = pneg %p1389
      $region50: #{tpu_custom_call.1} parent=5 // pred_check_branch
        %1392 = sbr.rel (%p1390) target = $region52
      $region51: #{tpu_custom_call.1} parent=5 // pred_region
        %s1393 = ssub.s32 %s14, 2
        // Predicated region
        $region53: #{tpu_custom_call.1} parent=51 // pred_check
          %p1394 = pneg %p167
        $region54: #{tpu_custom_call.1} parent=51 // pred_check_branch
          %1396 = sbr.rel (%p1394) target = $region56
        $region55: #{tpu_custom_call.1} parent=51 // pred_region
          %s1397 = sand.u32 %s152, 1
          %s1398 = scalar_lea.sflag [#allocation4], %s1397
          %s1399 = sand.u32 %s152, 1
          %s1400 = smul.addr %s1399, 8
          %s1401 = scalar_lea.vmem [#allocation3], %s1400
          %1403 = dma.done %s1398, 128
        $region56: #{tpu_custom_call.1} parent=51 // pred_fallthru
          _
      $region52: #{tpu_custom_call.1} parent=5 // pred_fallthru
        _
    $region6: #{tpu_custom_call.1} parent=1 // loop_footer
      %s18 = sadd.s32 1, %s14
    $region7: #{tpu_custom_call.1} parent=1 // loop_footer_branch
      %13 = sbr.rel target = $region3
    $region8: #{tpu_custom_call.1} parent=1 // loop_exit
      _
    %1404 = vsyncpa [#allocation4], 1
    %s1405 = scalar_lea.sflag [#allocation4], 1
    %1406 = vsyncpa %s1405, 1

</llo_original>
